<compile_context>
chip_gen: v5e
topology: v5e:2x2
jax: 0.10.0
libtpu: 0.0.40
codegen_flags: <defaults>
</compile_context>

<pallas_src>
import functools
import math

import jax
import jax.numpy as jnp
from jax import lax
from jax.experimental import pallas as pl
from jax.experimental.pallas import tpu as pltpu


# ------------------------------ fused kernel -------------------------------

def _conv_layer_kernel(pos_ref, x_ref, w_ref, b_ref, g_ref, beta_ref, o_ref,
                       m_ref, *, L):
    # pos_ref : (RB, 1)   int32  within-batch sequence position of each row
    # x_ref   : (RB, C)   f32    RB = TB*L rows (batch-major, seq-minor)
    # w_ref   : (3C, C)   bf16   tap-concatenated conv weights [W0; W1; W2]
    # b_ref   : (1, C)    f32    conv bias
    # g_ref   : (1, C)    f32    LayerNorm gamma
    # beta_ref: (1, C)    f32    LayerNorm beta
    # o_ref   : (RB//2, C) f32   pooled / normalized output rows
    # m_ref   : (RB, C)   f32    scratch: per-position 3-window max
    RB, C = x_ref.shape

    p = pos_ref[...]                        # (RB, 1) int32
    is_first = p == 0                       # l == 0     within its batch
    is_last = p == (L - 1)                  # l == L - 1 within its batch

    xb = x_ref[...]                         # (RB, C) f32

    # Circular taps x[l-1] / x[l+1] within each batch, entirely in vregs:
    # a global sublane roll is correct everywhere except the one boundary row
    # per batch, which is patched with a second roll that wraps inside the
    # batch.  (pltpu.roll == jnp.roll semantics; shifts kept non-negative.)
    x_prev = jnp.where(is_first,
                       pltpu.roll(xb, RB - (L - 1), axis=0),   # -> x[l + L - 1]
                       pltpu.roll(xb, 1, axis=0))              # -> x[l - 1]
    x_next = jnp.where(is_last,
                       pltpu.roll(xb, L - 1, axis=0),          # -> x[l - (L-1)]
                       pltpu.roll(xb, RB - 1, axis=0))         # -> x[l + 1]

    # Conv1d(k=3, circular) as ONE (RB, 3C) x (3C, C) MXU matmul.  Taps are
    # concatenated along the lane axis (free: C is a multiple of 128); operands
    # are bf16 (native MXU rate) with f32 accumulation.
    xcat = jnp.concatenate([x_prev, xb, x_next], axis=-1).astype(jnp.bfloat16)
    conv = jnp.dot(xcat, w_ref[...],
                   preferred_element_type=jnp.float32) + b_ref[...]   # (RB, C)

    # MaxPool1d(k=3, stride=2, padding=1): 3-way window max in vregs.  Pad
    # positions (and rows rolled in from the adjacent batch, which are exactly
    # those positions) are masked to -inf; the window centre is never masked,
    # so the pooled values stay finite.
    left = jnp.where(is_first, -jnp.inf, pltpu.roll(conv, 1, axis=0))
    right = jnp.where(is_last, -jnp.inf, pltpu.roll(conv, RB - 1, axis=0))
    m_ref[...] = jnp.maximum(jnp.maximum(left, right), conv)

    # Stride-2 downsample: with L even, pooled rows are the even rows of the
    # flattened block -> one sublane-strided load from the scratch.
    pooled = m_ref[pl.ds(0, RB // 2, stride=2), :]                     # (RB//2, C)

    # ELU (alpha = 1.0)
    act = jnp.where(pooled > 0,
                    pooled,
                    jnp.exp(jnp.minimum(pooled, 0.0)) - 1.0)

    # LayerNorm over the channel axis (eps = 1e-5)
    mean = jnp.mean(act, axis=-1, keepdims=True)
    var = jnp.mean((act - mean) ** 2, axis=-1, keepdims=True)
    normed = (act - mean) * lax.rsqrt(var + 1e-5)
    o_ref[...] = (normed * g_ref[...] + beta_ref[...]).astype(o_ref.dtype)


# --------------------------------- wrapper ----------------------------------

def _pick_batch_tile(B, L, target_rows=512):
    """Largest divisor of B whose row count TB*L stays within target_rows."""
    tb = 1
    for d in range(1, B + 1):
        if B % d == 0 and d * L <= max(L, target_rows):
            tb = d
    return tb


def conv_layer_forward(x, w, b, gamma, beta):
    """Fused ConvLayer forward.

    x: (B, L, d_model) f32.
    w: (3, d_model, d_model) f32 with w[k][c_in, c_out] = torch_weight[c_out, c_in, k].
    b, gamma, beta: (1, d_model) f32.
    Returns (B, L_out, d_model) f32 with L_out = L // 2.
    """
    B, L, C = x.shape
    assert C % 128 == 0, "d_model must be a multiple of 128 (lane-dense stores)"
    assert L % 8 == 0, "sequence length must be even and a multiple of 8"
    L_out = L // 2                    # == (L - 1)//2 + 1 for even L (MaxPool1d(3,2,1))

    TB = _pick_batch_tile(B, L)       # batches per grid step -> M = TB*L MXU rows
    RB = TB * L

    x2d = x.reshape(B * L, C)                                     # fold batch into rows
    pos = jnp.tile(jnp.arange(L, dtype=jnp.int32), B).reshape(B * L, 1)
    w_cat = w.reshape(3 * C, C).astype(jnp.bfloat16)              # [W0; W1; W2], bf16

    kernel = functools.partial(_conv_layer_kernel, L=L)

    out2d = pl.pallas_call(
        kernel,
        out_shape=jax.ShapeDtypeStruct((B * L_out, C), jnp.float32),
        grid=(B // TB,),
        in_specs=[
            pl.BlockSpec((RB, 1), lambda i: (i, 0)),              # positions
            pl.BlockSpec((RB, C), lambda i: (i, 0)),              # input rows
            pl.BlockSpec((3 * C, C), lambda i: (0, 0)),           # conv weights (resident)
            pl.BlockSpec((1, C), lambda i: (0, 0)),               # conv bias
            pl.BlockSpec((1, C), lambda i: (0, 0)),               # LN gamma
            pl.BlockSpec((1, C), lambda i: (0, 0)),               # LN beta
        ],
        out_specs=pl.BlockSpec((TB * L_out, C), lambda i: (i, 0)),
        scratch_shapes=[pltpu.VMEM((RB, C), jnp.float32)],        # pool-max scratch
        compiler_params=pltpu.CompilerParams(
            # "parallel" lets batch tiles shard across cores; for very long L /
            # large d_model, add an L_out grid axis (2-row halo) before scaling.
            dimension_semantics=("parallel",),
            vmem_limit_bytes=32 * 1024 * 1024,
        ),
    )(pos, x2d, w_cat, b, gamma, beta)

    return out2d.reshape(B, L_out, C)


# ------------------------- pure-JAX reference check -------------------------

def _ref_conv_layer(x, w, b, gamma, beta):
    B, L, C = x.shape
    x_prev = jnp.roll(x, 1, axis=1)                       # x[:, l-1] (circular)
    x_next = jnp.roll(x, -1, axis=1)                      # x[:, l+1] (circular)
    conv = (jnp.einsum("blc,cd->bld", x_prev, w[0])
            + jnp.einsum("blc,cd->bld", x, w[1])
            + jnp.einsum("blc,cd->bld", x_next, w[2])
            + b)
    L_out = (L - 1) // 2 + 1
    neg = jnp.full((B, 1, C), -jnp.inf, conv.dtype)
    padded = jnp.concatenate([neg, conv, neg], axis=1)    # (B, L+2, C)
    centers = 1 + 2 * jnp.arange(L_out)
    windows = jnp.stack([padded[:, centers - 1],
                         padded[:, centers],
                         padded[:, centers + 1]], axis=0)
    pooled = jnp.max(windows, axis=0)                     # (B, L_out, C)
    act = jnp.where(pooled > 0, pooled, jnp.expm1(pooled))
    mean = act.mean(-1, keepdims=True)
    var = ((act - mean) ** 2).mean(-1, keepdims=True)
    return (act - mean) * lax.rsqrt(var + 1e-5) * gamma + beta


# ----------------------------------- main -----------------------------------

if __name__ == "__main__":
    B, L, d_model = 2, 16, 128                            # small, lane-dense C
    key = jax.random.PRNGKey(0)
    kx, kw, kb, kg, kbe = jax.random.split(key, 5)

    x = jax.random.normal(kx, (B, L, d_model), jnp.float32)
    # w[k] = torch Conv1d weight[:, :, k].T  (stacked over the 3 taps)
    w = jax.random.normal(kw, (3, d_model, d_model), jnp.float32) * (
        1.0 / math.sqrt(3 * d_model))
    b = jax.random.normal(kb, (1, d_model), jnp.float32) * 0.05
    gamma = 1.0 + 0.1 * jax.random.normal(kg, (1, d_model), jnp.float32)
    beta = 0.1 * jax.random.normal(kbe, (1, d_model), jnp.float32)

    out = conv_layer_forward(x, w, b, gamma, beta)
    out = jax.block_until_ready(out)

    ref = _ref_conv_layer(x, w, b, gamma, beta)
    L_out = L // 2
    assert out.shape == (B, L_out, d_model), out.shape
    max_err = float(jnp.max(jnp.abs(out - ref)))
    # Tolerance reflects bf16 MXU operands (f32 accumulation) vs. the f32
    # reference; typical error is ~5e-3, threshold leaves headroom.
    assert max_err < 5e-2, max_err
    print("KERNEL_OK")
</pallas_src>

<mosaic_0001>
module attributes {stable_mosaic.version = 11 : i64} {
  func.func @_conv_layer_kernel(%arg0: i32, %arg1: memref<32x1xi32, #tpu.memory_space<vmem>>, %arg2: memref<32x128xf32, #tpu.memory_space<vmem>>, %arg3: memref<384x128xbf16, #tpu.memory_space<vmem>>, %arg4: memref<1x128xf32, #tpu.memory_space<vmem>>, %arg5: memref<1x128xf32, #tpu.memory_space<vmem>>, %arg6: memref<1x128xf32, #tpu.memory_space<vmem>>, %arg7: memref<16x128xf32, #tpu.memory_space<vmem>>, %arg8: memref<32x128xf32, #tpu.memory_space<vmem>>) attributes {dimension_semantics = [#tpu.dimension_semantics<parallel>], iteration_bounds = array<i64: 1>, scalar_prefetch = 0 : i64, scratch_operands = 1 : i64, tpu.core_type = #tpu.core_type<tc>, window_params = [{transform_indices = @transform_0, window_bounds = array<i64: 32, 1>}, {transform_indices = @transform_1, window_bounds = array<i64: 32, 128>}, {pipeline_mode = #tpu.pipeline_mode<synchronous>, transform_indices = @transform_2, window_bounds = array<i64: 384, 128>}, {pipeline_mode = #tpu.pipeline_mode<synchronous>, transform_indices = @transform_3, window_bounds = array<i64: 1, 128>}, {pipeline_mode = #tpu.pipeline_mode<synchronous>, transform_indices = @transform_4, window_bounds = array<i64: 1, 128>}, {pipeline_mode = #tpu.pipeline_mode<synchronous>, transform_indices = @transform_5, window_bounds = array<i64: 1, 128>}, {transform_indices = @transform_6, window_bounds = array<i64: 16, 128>}]} {
    %c0 = arith.constant 0 : index
    %c0_0 = arith.constant 0 : index
    %0 = vector.load %arg1[%c0, %c0_0] : memref<32x1xi32, #tpu.memory_space<vmem>>, vector<32x1xi32>
    %c0_i32 = arith.constant 0 : i32
    %1 = vector.broadcast %c0_i32 : i32 to vector<32x1xi32>
    %2 = arith.cmpi eq, %0, %1 : vector<32x1xi32>
    %c15_i32 = arith.constant 15 : i32
    %3 = vector.broadcast %c15_i32 : i32 to vector<32x1xi32>
    %4 = arith.cmpi eq, %0, %3 : vector<32x1xi32>
    %c0_1 = arith.constant 0 : index
    %c0_2 = arith.constant 0 : index
    %5 = vector.load %arg2[%c0_1, %c0_2] : memref<32x128xf32, #tpu.memory_space<vmem>>, vector<32x128xf32>
    %c17_i32 = arith.constant 17 : i32
    %6 = tpu.dynamic_rotate %5 by %c17_i32 dim 0 : vector<32x128xf32>, i32 -> vector<32x128xf32>
    %c1_i32 = arith.constant 1 : i32
    %7 = tpu.dynamic_rotate %5 by %c1_i32 dim 0 : vector<32x128xf32>, i32 -> vector<32x128xf32>
    %8 = vector.shape_cast %2 : vector<32x1xi1> to vector<32x1xi1>
    %9 = vector.broadcast %8 : vector<32x1xi1> to vector<32x128xi1>
    %10 = arith.select %9, %6, %7 : vector<32x128xi1>, vector<32x128xf32>
    %c15_i32_3 = arith.constant 15 : i32
    %11 = tpu.dynamic_rotate %5 by %c15_i32_3 dim 0 : vector<32x128xf32>, i32 -> vector<32x128xf32>
    %c31_i32 = arith.constant 31 : i32
    %12 = tpu.dynamic_rotate %5 by %c31_i32 dim 0 : vector<32x128xf32>, i32 -> vector<32x128xf32>
    %13 = vector.shape_cast %4 : vector<32x1xi1> to vector<32x1xi1>
    %14 = vector.broadcast %13 : vector<32x1xi1> to vector<32x128xi1>
    %15 = arith.select %14, %11, %12 : vector<32x128xi1>, vector<32x128xf32>
    %16 = tpu.concatenate %10, %5, %15 in 1 : vector<32x128xf32>, vector<32x128xf32>, vector<32x128xf32> -> vector<32x384xf32>
    %17 = arith.truncf %16 : vector<32x384xf32> to vector<32x384xbf16>
    %c0_4 = arith.constant 0 : index
    %c0_5 = arith.constant 0 : index
    %18 = vector.load %arg3[%c0_4, %c0_5] : memref<384x128xbf16, #tpu.memory_space<vmem>>, vector<384x128xbf16>
    %cst = arith.constant dense<0.000000e+00> : vector<32x128xf32>
    %19 = tpu.matmul %17, %18, %cst {dimension_numbers = #tpu.dot_dimension_numbers<[1], [0], [0], [1], [0, 0, 1, 1], [], []>} : vector<32x384xbf16>, vector<384x128xbf16>, vector<32x128xf32> -> vector<32x128xf32>
    %c0_6 = arith.constant 0 : index
    %c0_7 = arith.constant 0 : index
    %20 = vector.load %arg4[%c0_6, %c0_7] : memref<1x128xf32, #tpu.memory_space<vmem>>, vector<1x128xf32>
    %21 = vector.broadcast %20 : vector<1x128xf32> to vector<32x128xf32>
    %22 = arith.addf %19, %21 : vector<32x128xf32>
    %c1_i32_8 = arith.constant 1 : i32
    %23 = tpu.dynamic_rotate %22 by %c1_i32_8 dim 0 : vector<32x128xf32>, i32 -> vector<32x128xf32>
    %cst_9 = arith.constant 0xFF800000 : f32
    %24 = vector.shape_cast %2 : vector<32x1xi1> to vector<32x1xi1>
    %25 = vector.broadcast %24 : vector<32x1xi1> to vector<32x128xi1>
    %26 = vector.broadcast %cst_9 : f32 to vector<32x128xf32>
    %27 = arith.select %25, %26, %23 : vector<32x128xi1>, vector<32x128xf32>
    %c31_i32_10 = arith.constant 31 : i32
    %28 = tpu.dynamic_rotate %22 by %c31_i32_10 dim 0 : vector<32x128xf32>, i32 -> vector<32x128xf32>
    %cst_11 = arith.constant 0xFF800000 : f32
    %29 = vector.shape_cast %4 : vector<32x1xi1> to vector<32x1xi1>
    %30 = vector.broadcast %29 : vector<32x1xi1> to vector<32x128xi1>
    %31 = vector.broadcast %cst_11 : f32 to vector<32x128xf32>
    %32 = arith.select %30, %31, %28 : vector<32x128xi1>, vector<32x128xf32>
    %33 = arith.maximumf %27, %32 : vector<32x128xf32>
    %34 = arith.maximumf %33, %22 : vector<32x128xf32>
    %c0_12 = arith.constant 0 : index
    %c0_13 = arith.constant 0 : index
    %35 = vector.load %arg8[%c0_12, %c0_13] : memref<32x128xf32, #tpu.memory_space<vmem>>, vector<32x128xf32>
    tpu.vector_store %arg8[%c0_12, %c0_13], %34 {strides = array<i32>} : memref<32x128xf32, #tpu.memory_space<vmem>>, vector<32x128xf32>,
    %c0_14 = arith.constant 0 : index
    %c0_15 = arith.constant 0 : index
    %36 = tpu.strided_load %arg8[%c0_14, %c0_15] {strides = array<i32: 2, 1>} : memref<32x128xf32, #tpu.memory_space<vmem>>, vector<16x128xf32>
    %cst_16 = arith.constant 0.000000e+00 : f32
    %37 = vector.broadcast %cst_16 : f32 to vector<16x128xf32>
    %38 = arith.cmpf ogt, %36, %37 : vector<16x128xf32>
    %cst_17 = arith.constant 0.000000e+00 : f32
    %39 = vector.broadcast %cst_17 : f32 to vector<16x128xf32>
    %40 = arith.minimumf %36, %39 : vector<16x128xf32>
    %41 = math.exp %40 : vector<16x128xf32>
    %cst_18 = arith.constant 1.000000e+00 : f32
    %42 = vector.broadcast %cst_18 : f32 to vector<16x128xf32>
    %43 = arith.subf %41, %42 : vector<16x128xf32>
    %44 = arith.select %38, %36, %43 : vector<16x128xi1>, vector<16x128xf32>
    %cst_19 = arith.constant dense<0.000000e+00> : vector<16xf32>
    %45 = vector.multi_reduction <add>, %44, %cst_19 [1] : vector<16x128xf32> to vector<16xf32>
    %46 = vector.shape_cast %45 : vector<16xf32> to vector<16x1xf32>
    %cst_20 = arith.constant 1.280000e+02 : f32
    %47 = vector.broadcast %cst_20 : f32 to vector<16x1xf32>
    %48 = arith.divf %46, %47 : vector<16x1xf32>
    %49 = vector.broadcast %48 : vector<16x1xf32> to vector<16x128xf32>
    %50 = arith.subf %44, %49 : vector<16x128xf32>
    %51 = arith.mulf %50, %50 : vector<16x128xf32>
    %cst_21 = arith.constant dense<0.000000e+00> : vector<16xf32>
    %52 = vector.multi_reduction <add>, %51, %cst_21 [1] : vector<16x128xf32> to vector<16xf32>
    %53 = vector.shape_cast %52 : vector<16xf32> to vector<16x1xf32>
    %cst_22 = arith.constant 1.280000e+02 : f32
    %54 = vector.broadcast %cst_22 : f32 to vector<16x1xf32>
    %55 = arith.divf %53, %54 : vector<16x1xf32>
    %56 = vector.broadcast %48 : vector<16x1xf32> to vector<16x128xf32>
    %57 = arith.subf %44, %56 : vector<16x128xf32>
    %cst_23 = arith.constant 9.99999974E-6 : f32
    %58 = vector.broadcast %cst_23 : f32 to vector<16x1xf32>
    %59 = arith.addf %55, %58 : vector<16x1xf32>
    %60 = math.rsqrt %59 : vector<16x1xf32>
    %61 = vector.broadcast %60 : vector<16x1xf32> to vector<16x128xf32>
    %62 = arith.mulf %57, %61 : vector<16x128xf32>
    %c0_24 = arith.constant 0 : index
    %c0_25 = arith.constant 0 : index
    %63 = vector.load %arg5[%c0_24, %c0_25] : memref<1x128xf32, #tpu.memory_space<vmem>>, vector<1x128xf32>
    %64 = vector.broadcast %63 : vector<1x128xf32> to vector<16x128xf32>
    %65 = arith.mulf %62, %64 : vector<16x128xf32>
    %c0_26 = arith.constant 0 : index
    %c0_27 = arith.constant 0 : index
    %66 = vector.load %arg6[%c0_26, %c0_27] : memref<1x128xf32, #tpu.memory_space<vmem>>, vector<1x128xf32>
    %67 = vector.broadcast %66 : vector<1x128xf32> to vector<16x128xf32>
    %68 = arith.addf %65, %67 : vector<16x128xf32>
    %c0_28 = arith.constant 0 : index
    %c0_29 = arith.constant 0 : index
    %69 = vector.load %arg7[%c0_28, %c0_29] : memref<16x128xf32, #tpu.memory_space<vmem>>, vector<16x128xf32>
    tpu.vector_store %arg7[%c0_28, %c0_29], %68 {strides = array<i32>} : memref<16x128xf32, #tpu.memory_space<vmem>>, vector<16x128xf32>,
    return
  }
  func.func @transform_0(%arg0: i32) -> (i32, i32) {
    %c0_i32 = arith.constant 0 : i32
    %c0_i32_0 = arith.constant 0 : i32
    return %arg0, %c0_i32 : i32, i32
  }
  func.func @transform_1(%arg0: i32) -> (i32, i32) {
    %c0_i32 = arith.constant 0 : i32
    %c0_i32_0 = arith.constant 0 : i32
    return %arg0, %c0_i32 : i32, i32
  }
  func.func @transform_2(%arg0: i32) -> (i32, i32) {
    %c0_i32 = arith.constant 0 : i32
    %c0_i32_0 = arith.constant 0 : i32
    %c0_i32_1 = arith.constant 0 : i32
    return %c0_i32, %c0_i32_0 : i32, i32
  }
  func.func @transform_3(%arg0: i32) -> (i32, i32) {
    %c0_i32 = arith.constant 0 : i32
    %c0_i32_0 = arith.constant 0 : i32
    %c0_i32_1 = arith.constant 0 : i32
    return %c0_i32, %c0_i32_0 : i32, i32
  }
  func.func @transform_4(%arg0: i32) -> (i32, i32) {
    %c0_i32 = arith.constant 0 : i32
    %c0_i32_0 = arith.constant 0 : i32
    %c0_i32_1 = arith.constant 0 : i32
    return %c0_i32, %c0_i32_0 : i32, i32
  }
  func.func @transform_5(%arg0: i32) -> (i32, i32) {
    %c0_i32 = arith.constant 0 : i32
    %c0_i32_0 = arith.constant 0 : i32
    %c0_i32_1 = arith.constant 0 : i32
    return %c0_i32, %c0_i32_0 : i32, i32
  }
  func.func @transform_6(%arg0: i32) -> (i32, i32) {
    %c0_i32 = arith.constant 0 : i32
    %c0_i32_0 = arith.constant 0 : i32
    return %arg0, %c0_i32 : i32, i32
  }
}

</mosaic_0001>

<llo_original>
// kernel: tpu_custom_call.1
$region0: #{tpu_custom_call.1}
  #allocation0 [shape = 'u32[]', space=smem, size = 0x4, offset = 0x4, fixed_abs, tag = 'smem constant byte address 0x4 - core index']
  #allocation1 [shape = 'u32[72,128]{1,0:T(1,128)}', space=vmem, size = 0x9000, scoped, tag = 'internal scratch']
  #allocation2 [shape = 'f32[32,128]{1,0:T(8,128)}', space=vmem, size = 0x4000, scoped, tag = 'scratch operand']
  %s0 = inlined_call_operand.vmem [shape: s32[32,1], index: 0, kind: input, shape index: {}]
  %s1 = inlined_call_operand.vmem [shape: f32[32,128], index: 1, kind: input, shape index: {}]
  %s2 = inlined_call_operand.hbm [shape: bf16[384,128], index: 2, kind: input, shape index: {}]
  %s3 = inlined_call_operand.vmem [shape: f32[1,128], index: 3, kind: input, shape index: {}]
  %s4 = inlined_call_operand.vmem [shape: f32[1,128], index: 4, kind: input, shape index: {}]
  %s5 = inlined_call_operand.vmem [shape: f32[1,128], index: 5, kind: input, shape index: {}]
  %s6 = inlined_call_operand.hbm [shape: f32[16,128], index: 6, kind: output, shape index: {}]
  %s7 = sld [smem:[#allocation0]]
  $region38: #{tpu_custom_call.1} parent=0
    _
  %s9 = ssub.s32 1, %s7
  %s10 = scalar_select 0, %s9, %s7
  $region1: #{tpu_custom_call.1} parent=0
    #allocation3 [shape = 'u8[98304]{0}', space=vmem, size = 0x18000, scoped, tag = 'input window, operand 2, single buffered']
    #allocation4 [shape = 's32[1]{0}', space=sflag, size = 0x4, scoped, tag = 'scoped memory for tpu_custom_call.1']
    #allocation5 [shape = 's32[1]{0}', space=sflag, size = 0x4, scoped, tag = 'scoped memory for tpu_custom_call.1']
    #allocation6 [shape = 'u8[8192]{0}', space=vmem, size = 0x2000, scoped, tag = 'output window, operand 0, single buffered']
    %11 = vsyncpa [#allocation4], 0
    %12 = vsyncpa [#allocation5], 0
    // Predicated region
    $region2: #{tpu_custom_call.1} parent=1 // pred_check
      _
    $region3: #{tpu_custom_call.1} parent=1 // pred_check_branch
      %14 = sbr.rel (0) target = $region5
    $region4: #{tpu_custom_call.1} parent=1 // pred_region
      _
    $region5: #{tpu_custom_call.1} parent=1 // pred_fallthru
      _
    // Predicated region
    $region6: #{tpu_custom_call.1} parent=1 // pred_check
      _
    $region7: #{tpu_custom_call.1} parent=1 // pred_check_branch
      %16 = sbr.rel (0) target = $region9
    $region8: #{tpu_custom_call.1} parent=1 // pred_region
      _
    $region9: #{tpu_custom_call.1} parent=1 // pred_fallthru
      _
    // Predicated region
    $region10: #{tpu_custom_call.1} parent=1 // pred_check
      _
    $region11: #{tpu_custom_call.1} parent=1 // pred_check_branch
      %18 = sbr.rel (0) target = $region13
    $region12: #{tpu_custom_call.1} parent=1 // pred_region
      %20 = vsyncadd [#allocation4], 0
      %s21 = sshll.u32 %s2, 4
      %s22 = int_to_ptr.hbm [resolvable:$true] %s21
      %s23 = sshll.u32 [#allocation3], 4
      %s24 = int_to_ptr.vmem [resolvable:$true] %s23
      %29 = dma.hbm_to_vmem [thread:$0]  %s22, 3072, %s24, [#allocation4], 64, 64, 4
    $region13: #{tpu_custom_call.1} parent=1 // pred_fallthru
      _
    // Predicated region
    $region14: #{tpu_custom_call.1} parent=1 // pred_check
      _
    $region15: #{tpu_custom_call.1} parent=1 // pred_check_branch
      %31 = sbr.rel (0) target = $region17
    $region16: #{tpu_custom_call.1} parent=1 // pred_region
      _
    $region17: #{tpu_custom_call.1} parent=1 // pred_fallthru
      _
    // Predicated region
    $region18: #{tpu_custom_call.1} parent=1 // pred_check
      _
    $region19: #{tpu_custom_call.1} parent=1 // pred_check_branch
      %33 = sbr.rel (0) target = $region21
    $region20: #{tpu_custom_call.1} parent=1 // pred_region
      _
    $region21: #{tpu_custom_call.1} parent=1 // pred_fallthru
      _
    // Predicated region
    $region22: #{tpu_custom_call.1} parent=1 // pred_check
      _
    $region23: #{tpu_custom_call.1} parent=1 // pred_check_branch
      %35 = sbr.rel (0) target = $region25
    $region24: #{tpu_custom_call.1} parent=1 // pred_region
      _
    $region25: #{tpu_custom_call.1} parent=1 // pred_fallthru
      _
    // Predicated region
    $region26: #{tpu_custom_call.1} parent=1 // pred_check
      _
    $region27: #{tpu_custom_call.1} parent=1 // pred_check_branch
      %37 = sbr.rel (0) target = $region29
    $region28: #{tpu_custom_call.1} parent=1 // pred_region
      %39 = dma.done [#allocation4], 3072
    $region29: #{tpu_custom_call.1} parent=1 // pred_fallthru
      _
    %v40 = vld [vmem:[%s0] sm:$0xff]
    %v41 = vld [vmem:[%s0 + $0x8] sm:$0xff]
    %v42 = vld [vmem:[%s0 + $0x10] sm:$0xff]
    %v43 = vld [vmem:[%s0 + $0x18] sm:$0xff]
    %vm44 = vcmp.eq.s32.totalorder %v40, 0
    %vm45 = vcmp.eq.s32.totalorder %v41, 0
    %vm46 = vcmp.eq.s32.totalorder %v42, 0
    %vm47 = vcmp.eq.s32.totalorder %v43, 0
    %vm48 = vcmp.eq.s32.totalorder %v40, 15
    %vm49 = vcmp.eq.s32.totalorder %v41, 15
    %vm50 = vcmp.eq.s32.totalorder %v42, 15
    %vm51 = vcmp.eq.s32.totalorder %v43, 15
    %v52 = vld [vmem:[%s1] sm:$0xff]
    %v53 = vld [vmem:[%s1 + $0x8] sm:$0xff]
    %v54 = vld [vmem:[%s1 + $0x10] sm:$0xff]
    %v55 = vld [vmem:[%s1 + $0x18] sm:$0xff]
    %v56 = vrot.slane %v52, 7
    %v57 = vrot.slane %v53, 7
    %v58 = vrot.slane %v54, 7
    %v59 = vrot.slane %v55, 7
    %v60 = vlaneseq
    %v61 = vshrl.u32 %v60, 7
    %vm62 = vcmp.lt.s32.totalorder %v61, 1
    %v63 = vsel %vm62, %v58, %v59
    %v64 = vsel %vm62, %v57, %v58
    %v65 = vsel %vm62, %v56, %v57
    %v66 = vsel %vm62, %v59, %v56
    %v67 = vsel %vm44, 1, 0
    %v68 = vsel %vm45, 1, 0
    %v69 = vsel %vm46, 1, 0
    %v70 = vsel %vm47, 1, 0
    %71 = vset.pattern.permute.xlu0 0
    %72 = vperm.xlu0 %71, %v67
    %v73 = vpop.permute.xlu0 %72
    %74 = vset.pattern.permute.xlu0 0
    %75 = vperm.xlu0 %74, %v68
    %v76 = vpop.permute.xlu0 %75
    %77 = vset.pattern.permute.xlu0 0
    %78 = vperm.xlu0 %77, %v69
    %v79 = vpop.permute.xlu0 %78
    %80 = vset.pattern.permute.xlu0 0
    %81 = vperm.xlu0 %80, %v70
    %v82 = vpop.permute.xlu0 %81
    %vm83 = vcmp.eq.s32.totalorder %v73, 1
    %vm84 = vcmp.eq.s32.totalorder %v76, 1
    %vm85 = vcmp.eq.s32.totalorder %v79, 1
    %vm86 = vcmp.eq.s32.totalorder %v82, 1
    %v87 = vsel %vm83, %v64, %v66
    %v88 = vsel %vm84, %v63, %v65
    %v89 = vsel %vm85, %v66, %v64
    %v90 = vsel %vm86, %v65, %v63
    %v91 = vrot.slane %v52, 1
    %v92 = vrot.slane %v53, 1
    %v93 = vrot.slane %v54, 1
    %v94 = vrot.slane %v55, 1
    %vm95 = vcmp.lt.s32.totalorder %v61, 7
    %v96 = vsel %vm95, %v93, %v94
    %v97 = vsel %vm95, %v92, %v93
    %v98 = vsel %vm95, %v91, %v92
    %v99 = vsel %vm95, %v94, %v91
    %v100 = vsel %vm48, 1, 0
    %v101 = vsel %vm49, 1, 0
    %v102 = vsel %vm50, 1, 0
    %v103 = vsel %vm51, 1, 0
    %104 = vset.pattern.permute.xlu0 0
    %105 = vperm.xlu0 %104, %v100
    %v106 = vpop.permute.xlu0 %105
    %107 = vset.pattern.permute.xlu0 0
    %108 = vperm.xlu0 %107, %v101
    %v109 = vpop.permute.xlu0 %108
    %110 = vset.pattern.permute.xlu0 0
    %111 = vperm.xlu0 %110, %v102
    %v112 = vpop.permute.xlu0 %111
    %113 = vset.pattern.permute.xlu0 0
    %114 = vperm.xlu0 %113, %v103
    %v115 = vpop.permute.xlu0 %114
    %vm116 = vcmp.eq.s32.totalorder %v106, 1
    %vm117 = vcmp.eq.s32.totalorder %v109, 1
    %vm118 = vcmp.eq.s32.totalorder %v112, 1
    %vm119 = vcmp.eq.s32.totalorder %v115, 1
    %v120 = vsel %vm116, %v96, %v98
    %v121 = vsel %vm117, %v99, %v97
    %v122 = vsel %vm118, %v98, %v96
    %v123 = vsel %vm119, %v97, %v99
    %v124 = vpack.c.bf16 %v88, %v87
    %v125 = vpack.c.bf16 %v53, %v52
    %v126 = vpack.c.bf16 %v121, %v120
    %v127 = vpack.c.bf16 %v90, %v89
    %v128 = vpack.c.bf16 %v55, %v54
    %v129 = vpack.c.bf16 %v123, %v122
    %v130 = vld [vmem:[#allocation3] sm:$0xf]
    %v131 = vld [vmem:[#allocation3 + $0x4] sm:$0xf]
    %v132 = vld [vmem:[#allocation3 + $0x8] sm:$0xf]
    %v133 = vld [vmem:[#allocation3 + $0xc] sm:$0xf]
    %v134 = vld [vmem:[#allocation3 + $0x10] sm:$0xf]
    %v135 = vld [vmem:[#allocation3 + $0x14] sm:$0xf]
    %v136 = vld [vmem:[#allocation3 + $0x18] sm:$0xf]
    %v137 = vld [vmem:[#allocation3 + $0x1c] sm:$0xf]
    %v138 = vld [vmem:[#allocation3 + $0x20] sm:$0xf]
    %v139 = vld [vmem:[#allocation3 + $0x24] sm:$0xf]
    %v140 = vld [vmem:[#allocation3 + $0x28] sm:$0xf]
    %v141 = vld [vmem:[#allocation3 + $0x2c] sm:$0xf]
    %v142 = vld [vmem:[#allocation3 + $0x30] sm:$0xf]
    %v143 = vld [vmem:[#allocation3 + $0x34] sm:$0xf]
    %v144 = vld [vmem:[#allocation3 + $0x38] sm:$0xf]
    %v145 = vld [vmem:[#allocation3 + $0x3c] sm:$0xf]
    %v146 = vld [vmem:[#allocation3 + $0x40] sm:$0xf]
    %v147 = vld [vmem:[#allocation3 + $0x44] sm:$0xf]
    %v148 = vld [vmem:[#allocation3 + $0x48] sm:$0xf]
    %v149 = vld [vmem:[#allocation3 + $0x4c] sm:$0xf]
    %v150 = vld [vmem:[#allocation3 + $0x50] sm:$0xf]
    %v151 = vld [vmem:[#allocation3 + $0x54] sm:$0xf]
    %v152 = vld [vmem:[#allocation3 + $0x58] sm:$0xf]
    %v153 = vld [vmem:[#allocation3 + $0x5c] sm:$0xf]
    %v154 = vld [vmem:[#allocation3 + $0x60] sm:$0xf]
    %v155 = vld [vmem:[#allocation3 + $0x64] sm:$0xf]
    %v156 = vld [vmem:[#allocation3 + $0x68] sm:$0xf]
    %v157 = vld [vmem:[#allocation3 + $0x6c] sm:$0xf]
    %v158 = vld [vmem:[#allocation3 + $0x70] sm:$0xf]
    %v159 = vld [vmem:[#allocation3 + $0x74] sm:$0xf]
    %v160 = vld [vmem:[#allocation3 + $0x78] sm:$0xf]
    %v161 = vld [vmem:[#allocation3 + $0x7c] sm:$0xf]
    %v162 = vld [vmem:[#allocation3 + $0x80] sm:$0xf]
    %v163 = vld [vmem:[#allocation3 + $0x84] sm:$0xf]
    %v164 = vld [vmem:[#allocation3 + $0x88] sm:$0xf]
    %v165 = vld [vmem:[#allocation3 + $0x8c] sm:$0xf]
    %v166 = vld [vmem:[#allocation3 + $0x90] sm:$0xf]
    %v167 = vld [vmem:[#allocation3 + $0x94] sm:$0xf]
    %v168 = vld [vmem:[#allocation3 + $0x98] sm:$0xf]
    %v169 = vld [vmem:[#allocation3 + $0x9c] sm:$0xf]
    %v170 = vld [vmem:[#allocation3 + $0xa0] sm:$0xf]
    %v171 = vld [vmem:[#allocation3 + $0xa4] sm:$0xf]
    %v172 = vld [vmem:[#allocation3 + $0xa8] sm:$0xf]
    %v173 = vld [vmem:[#allocation3 + $0xac] sm:$0xf]
    %v174 = vld [vmem:[#allocation3 + $0xb0] sm:$0xf]
    %v175 = vld [vmem:[#allocation3 + $0xb4] sm:$0xf]
    %v176 = vld [vmem:[#allocation3 + $0xb8] sm:$0xf]
    %v177 = vld [vmem:[#allocation3 + $0xbc] sm:$0xf]
    %v178 = vld [vmem:[%s3] sm:$0x1]
    %v180 = vperm.slane %v178, 0
    %v230 = vunpack.c.l.b16 %v130
    %v231 = vunpack.c.l.b16 %v131
    %v232 = vunpack.c.l.b16 %v132
    %v233 = vunpack.c.l.b16 %v133
    %v234 = vunpack.c.l.b16 %v134
    %v235 = vunpack.c.l.b16 %v135
    %v236 = vunpack.c.l.b16 %v136
    %v237 = vunpack.c.l.b16 %v137
    %v238 = vunpack.c.l.b16 %v138
    %v239 = vunpack.c.l.b16 %v139
    %v240 = vunpack.c.l.b16 %v140
    %v241 = vunpack.c.l.b16 %v141
    %v242 = vunpack.c.l.b16 %v142
    %v243 = vunpack.c.l.b16 %v143
    %v244 = vunpack.c.l.b16 %v144
    %v245 = vunpack.c.l.b16 %v145
    %v246 = vunpack.c.l.b16 %v146
    %v247 = vunpack.c.l.b16 %v147
    %v248 = vunpack.c.l.b16 %v148
    %v249 = vunpack.c.l.b16 %v149
    %v250 = vunpack.c.l.b16 %v150
    %v251 = vunpack.c.l.b16 %v151
    %v252 = vunpack.c.l.b16 %v152
    %v253 = vunpack.c.l.b16 %v153
    %v254 = vunpack.c.l.b16 %v154
    %v255 = vunpack.c.l.b16 %v155
    %v256 = vunpack.c.l.b16 %v156
    %v257 = vunpack.c.l.b16 %v157
    %v258 = vunpack.c.l.b16 %v158
    %v259 = vunpack.c.l.b16 %v159
    %v260 = vunpack.c.l.b16 %v160
    %v261 = vunpack.c.l.b16 %v161
    %v262 = vunpack.c.l.b16 %v162
    %v263 = vunpack.c.l.b16 %v163
    %v264 = vunpack.c.l.b16 %v164
    %v265 = vunpack.c.l.b16 %v165
    %v266 = vunpack.c.l.b16 %v166
    %v267 = vunpack.c.l.b16 %v167
    %v268 = vunpack.c.l.b16 %v168
    %v269 = vunpack.c.l.b16 %v169
    %v270 = vunpack.c.l.b16 %v170
    %v271 = vunpack.c.l.b16 %v171
    %v272 = vunpack.c.l.b16 %v172
    %v273 = vunpack.c.l.b16 %v173
    %v274 = vunpack.c.l.b16 %v174
    %v275 = vunpack.c.l.b16 %v175
    %v276 = vunpack.c.l.b16 %v176
    %v277 = vunpack.c.l.b16 %v177
    %v278 = vpack.c.b16 %v231, %v230
    %v279 = vpack.c.b16 %v233, %v232
    %v280 = vpack.c.b16 %v235, %v234
    %v281 = vpack.c.b16 %v237, %v236
    %v282 = vpack.c.b16 %v239, %v238
    %v283 = vpack.c.b16 %v241, %v240
    %v284 = vpack.c.b16 %v243, %v242
    %v285 = vpack.c.b16 %v245, %v244
    %v286 = vpack.c.b16 %v247, %v246
    %v287 = vpack.c.b16 %v249, %v248
    %v288 = vpack.c.b16 %v251, %v250
    %v289 = vpack.c.b16 %v253, %v252
    %v290 = vpack.c.b16 %v255, %v254
    %v291 = vpack.c.b16 %v257, %v256
    %v292 = vpack.c.b16 %v259, %v258
    %v293 = vpack.c.b16 %v261, %v260
    %v294 = vpack.c.b16 %v263, %v262
    %v295 = vpack.c.b16 %v265, %v264
    %v296 = vpack.c.b16 %v267, %v266
    %v297 = vpack.c.b16 %v269, %v268
    %v298 = vpack.c.b16 %v271, %v270
    %v299 = vpack.c.b16 %v273, %v272
    %v300 = vpack.c.b16 %v275, %v274
    %v301 = vpack.c.b16 %v277, %v276
    %326 = vmatpush.bf16.msra.mxu0 %v285
    %327 = vmatpush.bf16.msra.mxu0 %v284
    %328 = vmatpush.bf16.msra.mxu0 %v283
    %329 = vmatpush.bf16.msra.mxu0 %v282
    %330 = vmatpush.bf16.msra.mxu0 %v281
    %331 = vmatpush.bf16.msra.mxu0 %v280
    %332 = vmatpush.bf16.msra.mxu0 %v279
    %333 = vmatpush.bf16.msra.mxu0 %v278
    %334 = vmatmul.bf16.gmra.mxu0 %v124
    %v335 = vpop.f32.mrf.mxu0
    %v336 = vadd.f32 %v180, %v335
    %v337 = vpop.f32.mrf.mxu0
    %v338 = vadd.f32 %v180, %v337
    %339 = vmatmul.bf16.gmra.mxu0 %v127
    %v340 = vpop.f32.mrf.mxu0
    %v341 = vadd.f32 %v180, %v340
    %v342 = vpop.f32.mrf.mxu0
    %v343 = vadd.f32 %v180, %v342
    %344 = vdwg.mxu0
    %345 = vmatpush.bf16.msra.mxu0 %v293
    %346 = vmatpush.bf16.msra.mxu0 %v292
    %347 = vmatpush.bf16.msra.mxu0 %v291
    %348 = vmatpush.bf16.msra.mxu0 %v290
    %349 = vmatpush.bf16.msra.mxu0 %v289
    %350 = vmatpush.bf16.msra.mxu0 %v288
    %351 = vmatpush.bf16.msra.mxu0 %v287
    %352 = vmatpush.bf16.msra.mxu0 %v286
    %353 = vmatmul.bf16.gmra.mxu0 %v125
    %v354 = vpop.f32.mrf.mxu0
    %v355 = vadd.f32 %v336, %v354
    %v356 = vpop.f32.mrf.mxu0
    %v357 = vadd.f32 %v338, %v356
    %358 = vmatmul.bf16.gmra.mxu0 %v128
    %v359 = vpop.f32.mrf.mxu0
    %v360 = vadd.f32 %v341, %v359
    %v361 = vpop.f32.mrf.mxu0
    %v362 = vadd.f32 %v343, %v361
    %363 = vdwg.mxu0
    %364 = vmatpush.bf16.msra.mxu0 %v301
    %365 = vmatpush.bf16.msra.mxu0 %v300
    %366 = vmatpush.bf16.msra.mxu0 %v299
    %367 = vmatpush.bf16.msra.mxu0 %v298
    %368 = vmatpush.bf16.msra.mxu0 %v297
    %369 = vmatpush.bf16.msra.mxu0 %v296
    %370 = vmatpush.bf16.msra.mxu0 %v295
    %371 = vmatpush.bf16.msra.mxu0 %v294
    %372 = vmatmul.bf16.gmra.mxu0 %v126
    %v373 = vpop.f32.mrf.mxu0
    %v374 = vadd.f32 %v355, %v373
    %v375 = vpop.f32.mrf.mxu0
    %v376 = vadd.f32 %v357, %v375
    %377 = vmatmul.bf16.gmra.mxu0 %v129
    %v378 = vpop.f32.mrf.mxu0
    %v379 = vadd.f32 %v360, %v378
    %v380 = vpop.f32.mrf.mxu0
    %v381 = vadd.f32 %v362, %v380
    %382 = vdwg.mxu0
    %v383 = vrot.slane %v374, 7
    %v384 = vrot.slane %v376, 7
    %v385 = vrot.slane %v379, 7
    %v386 = vrot.slane %v381, 7
    %v387 = vsel %vm62, %v385, %v386
    %v388 = vsel %vm62, %v384, %v385
    %v389 = vsel %vm62, %v383, %v384
    %v390 = vsel %vm62, %v386, %v383
    %v391 = vsel %vm83, -inf, %v390
    %v392 = vsel %vm84, -inf, %v389
    %v393 = vsel %vm85, -inf, %v388
    %v394 = vsel %vm86, -inf, %v387
    %v395 = vrot.slane %v374, 1
    %v396 = vrot.slane %v376, 1
    %v397 = vrot.slane %v379, 1
    %v398 = vrot.slane %v381, 1
    %v399 = vsel %vm95, %v397, %v398
    %v400 = vsel %vm95, %v396, %v397
    %v401 = vsel %vm95, %v395, %v396
    %v402 = vsel %vm95, %v398, %v395
    %v403 = vsel %vm116, -inf, %v401
    %v404 = vsel %vm117, -inf, %v400
    %v405 = vsel %vm118, -inf, %v399
    %v406 = vsel %vm119, -inf, %v402
    %v407 = vmax.f32 %v391, %v403
    %v408 = vmax.f32 %v392, %v404
    %v409 = vmax.f32 %v393, %v405
    %v410 = vmax.f32 %v394, %v406
    %v411 = vmax.f32 %v407, %v374
    %v412 = vmax.f32 %v408, %v376
    %v413 = vmax.f32 %v409, %v379
    %v414 = vmax.f32 %v410, %v381
    %415 = vst [vmem:[#allocation2] sm:$0xff] %v411
    %416 = vst [vmem:[#allocation2 + $0x8] sm:$0xff] %v412
    %417 = vst [vmem:[#allocation2 + $0x10] sm:$0xff] %v413
    %418 = vst [vmem:[#allocation2 + $0x18] sm:$0xff] %v414
    %v419 = vld [vmem:[#allocation2] ss:$2 sm:$0xff]
    %s420 = scalar_lea.vmem [#allocation2], 16
    %v421 = vld [vmem:[%s420] ss:$2 sm:$0xff]
    %vm422 = vcmp.gt.f32.partialorder %v419, 0.0
    %vm423 = vcmp.gt.f32.partialorder %v421, 0.0
    %v424 = vmin.f32 %v419, 0.0
    %v425 = vmin.f32 %v421, 0.0
    %v426 = vmul.f32 %v424, 1.442695
    %v427 = vpow.pop %v426
    %v428 = vmul.f32 %v425, 1.442695
    %v429 = vpow.pop %v428
    %v430 = vsub.f32 %v427, 1.0
    %v431 = vsub.f32 %v429, 1.0
    %v432 = vsel %vm422, %v419, %v430
    %v433 = vsel %vm423, %v421, %v431
    %434 = vadd.xlane.f32.xlu0 %v432
    %v435 = vpop.xlane.xlu0 %434
    %436 = vadd.xlane.f32.xlu0 %v433
    %v437 = vpop.xlane.xlu0 %436
    %v438 = vrcp.pop 128.0
    %v439 = vmul.f32 128.0, %v438
    %v440 = vsub.f32 1.0, %v439
    %v441 = vmul.f32 %v438, %v440
    %v442 = vadd.f32 %v438, %v441
    %vm443 = vweird.f32 %v438
    %v444 = vsel %vm443, %v438, %v442
    %v445 = vmul.f32 %v435, %v444
    %v446 = vmul.f32 %v437, %v444
    %v447 = vsub.f32 %v432, %v445
    %v448 = vsub.f32 %v433, %v446
    %v449 = vmul.f32 %v447, %v447
    %v450 = vmul.f32 %v448, %v448
    %451 = vadd.xlane.f32.xlu0 %v449
    %v452 = vpop.xlane.xlu0 %451
    %453 = vadd.xlane.f32.xlu0 %v450
    %v454 = vpop.xlane.xlu0 %453
    %v455 = vmul.f32 %v452, %v444
    %v456 = vmul.f32 %v454, %v444
    %v457 = vadd.f32 %v455, 1e-05
    %v458 = vadd.f32 %v456, 1e-05
    %v459 = vrsqrt.pop %v457
    %v460 = vmul.f32 %v459, %v457
    %v461 = vmul.f32 %v460, %v459
    %v462 = vmul.f32 0.5, %v461
    %v463 = vsub.f32 1.5, %v462
    %v464 = vmul.f32 %v459, %v463
    %vm465 = vweird.f32 %v457
    %vm466 = vweird.f32 %v459
    %vm467 = vmor %vm465, %vm466
    %v468 = vsel %vm467, %v459, %v464
    %v469 = vrsqrt.pop %v458
    %v470 = vmul.f32 %v469, %v458
    %v471 = vmul.f32 %v470, %v469
    %v472 = vmul.f32 0.5, %v471
    %v473 = vsub.f32 1.5, %v472
    %v474 = vmul.f32 %v469, %v473
    %vm475 = vweird.f32 %v458
    %vm476 = vweird.f32 %v469
    %vm477 = vmor %vm475, %vm476
    %v478 = vsel %vm477, %v469, %v474
    %v479 = vmul.f32 %v447, %v468
    %v480 = vmul.f32 %v448, %v478
    %v481 = vld [vmem:[%s4] sm:$0x1]
    %v483 = vperm.slane %v481, 0
    %v485 = vmul.f32 %v479, %v483
    %v486 = vmul.f32 %v480, %v483
    %v487 = vld [vmem:[%s5] sm:$0x1]
    %v489 = vperm.slane %v487, 0
    %v491 = vadd.f32 %v485, %v489
    %v492 = vadd.f32 %v486, %v489
    %493 = vst [vmem:[#allocation6] sm:$0xff] %v491
    %494 = vst [vmem:[#allocation6 + $0x8] sm:$0xff] %v492
    // Predicated region
    $region30: #{tpu_custom_call.1} parent=1 // pred_check
      _
    $region31: #{tpu_custom_call.1} parent=1 // pred_check_branch
      %496 = sbr.rel (0) target = $region33
    $region32: #{tpu_custom_call.1} parent=1 // pred_region
      %498 = vsyncadd [#allocation5], 0
      %s499 = sshll.u32 [#allocation6], 4
      %s500 = int_to_ptr.vmem [resolvable:$true] %s499
      %s501 = sshll.u32 %s6, 4
      %s502 = int_to_ptr.hbm [resolvable:$true] %s501
      %507 = dma.vmem_to_hbm [thread:$0]  %s500, 256, %s502, [#allocation5], 128, 128, 8
    $region33: #{tpu_custom_call.1} parent=1 // pred_fallthru
      _
    // Predicated region
    $region34: #{tpu_custom_call.1} parent=1 // pred_check
      _
    $region35: #{tpu_custom_call.1} parent=1 // pred_check_branch
      %509 = sbr.rel (0) target = $region37
    $region36: #{tpu_custom_call.1} parent=1 // pred_region
      %511 = dma.done [#allocation5], 256
    $region37: #{tpu_custom_call.1} parent=1 // pred_fallthru
      _
    %512 = vsyncpa [#allocation4], 1
    %513 = vsyncpa [#allocation5], 1

</llo_original>
